<compile_context>
chip_gen: v6e
topology: v6e:2x2x1
jax: 0.10.0
libtpu: 0.0.40
codegen_flags: <defaults>
</compile_context>

<pallas_src>
import functools

import jax
import jax.numpy as jnp
from jax import lax
from jax.experimental import pallas as pl
from jax.experimental.pallas import tpu as pltpu


# ---------------------------------------------------------------------------
# Stateless counter-based normal generator (hash + Box-Muller), int32-only math
# so it lowers on Mosaic TPU *and* in Pallas interpret mode.
# ---------------------------------------------------------------------------

def _i32(c):
    """Wrap a Python int into an int32 constant (two's complement)."""
    c &= 0xFFFFFFFF
    if c >= (1 << 31):
        c -= 1 << 32
    return jnp.int32(c)


_M1 = 0x85EBCA6B      # murmur3 fmix32 constants
_M2 = 0xC2B2AE35
_GOLD = 0x9E3779B9    # golden-ratio stride for the element counter
_S1 = 0x2545F491      # stream-separation constants for the two uniforms
_S2 = 0x68E31DA4


def _srl(h, n):
    """Logical right shift on int32: arithmetic shift + mask of sign bits."""
    mask = (1 << (32 - n)) - 1
    return (h >> n) & _i32(mask)


def _fmix32(h):
    h = h ^ _srl(h, 16)
    h = h * _i32(_M1)
    h = h ^ _srl(h, 13)
    h = h * _i32(_M2)
    h = h ^ _srl(h, 16)
    return h


def _uniform24(bits):
    """int32 hash -> f32 uniform in [0, 1) from 24 bits (exact i32->f32)."""
    b24 = _srl(bits, 8)                                   # [0, 2^24)
    return b24.astype(jnp.float32) * jnp.float32(2.0 ** -24)


# ---------------------------------------------------------------------------
# Kernel
# ---------------------------------------------------------------------------

def _gaussian_noise_kernel(seed_ref, scale_ref, x_ref, log_emac_ref, o_ref,
                           *, noise_type, quantize_energy, tm, cols):
    # seed_ref, scale_ref: scalar-prefetch SMEM refs.
    # x_ref: (tm, cols) VMEM tile; log_emac_ref: (tm, 1) VMEM column.

    # Per-channel std-dev column with scale_factor folded in once.
    emac = jnp.exp(log_emac_ref[...])                     # (tm, 1)
    if quantize_energy:
        emac = jnp.round(emac)                            # RoundSTE.forward == round
    if noise_type == 'shot':
        sd = lax.rsqrt(emac)
    elif noise_type == 'thermal':
        sd = lax.rsqrt(emac) * jnp.float32(0.01)
    elif noise_type == 'weight':
        sd = lax.rsqrt(emac * jnp.float32(100.0))
    else:
        raise ValueError(noise_type)
    nscale = sd * scale_ref[0]                            # (tm, 1)

    # Counter-based randn_like(x): global element index -> two decorrelated
    # uniforms -> Box-Muller.  Independent per tile, invariant to tiling.
    row = lax.broadcasted_iota(jnp.int32, (tm, cols), 0)
    col = lax.broadcasted_iota(jnp.int32, (tm, cols), 1)
    gidx = (pl.program_id(0) * tm + row) * cols + col     # global flat index
    base = gidx * _i32(_GOLD) + seed_ref[0]
    u1 = _uniform24(_fmix32(base ^ _i32(_S1)))
    u2 = _uniform24(_fmix32(base ^ _i32(_S2)))
    u1 = u1 + jnp.float32(2.0 ** -25)                     # keep u1 > 0 (avoid log(0))
    r = jnp.sqrt(jnp.float32(-2.0) * jnp.log(u1))
    theta = jnp.float32(2.0 * 3.141592653589793) * u2
    noise = r * jnp.cos(theta)                            # ~ N(0, 1)

    # Cast the final sum (not the noise term) so narrower out dtypes stay exact.
    o_ref[...] = (x_ref[...] + noise * nscale).astype(o_ref.dtype)


# ---------------------------------------------------------------------------
# Wrapper
# ---------------------------------------------------------------------------

_TARGET_TILE_ELEMS = 512 * 1024   # ~2 MiB f32 per tile buffer: double-buffered
                                  # in+out stays well inside v7x's 64 MiB VMEM.


def _choose_row_tile(rows, cols):
    if rows <= 8:
        return rows
    tm = max(8, _TARGET_TILE_ELEMS // max(cols, 1))
    tm = max(8, (tm // 8) * 8)    # keep the (8, 128) sublane constraint
    return min(tm, rows)


def gaussian_forward(x, log_emac, scale_factor, seed,
                     noise_type='shot', quantize_energy=False, add_noise=True):
    """x: (N, C, H, W) float32; log_emac: (C, 1, 1) float32 (broadcasts like PyTorch)."""
    if noise_type not in ('shot', 'thermal', 'weight'):
        raise ValueError(noise_type)
    if not add_noise:
        return x

    N, C, H, W = x.shape
    rows, cols = N * C, H * W

    # NCHW -> (N*C, H*W): spatial on lanes (lane-dense, multiple of 128);
    # per-channel log_emac expanded to one value per row.
    x2 = x.reshape(rows, cols)
    lem_col = jnp.broadcast_to(log_emac.reshape(1, C), (N, C)).reshape(rows, 1)

    tm = _choose_row_tile(rows, cols)
    grid = (pl.cdiv(rows, tm),)

    kernel = functools.partial(_gaussian_noise_kernel,
                               noise_type=noise_type,
                               quantize_energy=quantize_energy,
                               tm=tm, cols=cols)

    out2 = pl.pallas_call(
        kernel,
        out_shape=jax.ShapeDtypeStruct((rows, cols), x.dtype),
        grid_spec=pltpu.PrefetchScalarGridSpec(
            num_scalar_prefetch=2,          # seed, scale_factor -> SMEM
            grid=grid,
            in_specs=[
                pl.BlockSpec((tm, cols), lambda i, seed, sc: (i, 0)),
                pl.BlockSpec((tm, 1),    lambda i, seed, sc: (i, 0)),
            ],
            out_specs=pl.BlockSpec((tm, cols), lambda i, seed, sc: (i, 0)),
        ),
        compiler_params=pltpu.CompilerParams(
            dimension_semantics=("parallel",)),   # megacore-shardable on v7x
    )(
        jnp.asarray([seed], jnp.int32),
        jnp.asarray([scale_factor], jnp.float32),
        x2,
        lem_col,
    )
    return out2.reshape(N, C, H, W)


if __name__ == "__main__":
    key = jax.random.PRNGKey(0)

    N, C, H, W = 2, 4, 16, 16
    x = jax.random.normal(key, (N, C, H, W), dtype=jnp.float32)

    # Deterministic parameter init, mirroring:
    #   self.log_emac = nn.Parameter(torch.log(torch.ones(shape) * emac))
    emac0 = 4.0
    log_emac = jnp.log(jnp.ones((C, 1, 1), jnp.float32) * emac0)

    # scale_factor is set externally on the module before forward; use 1.0 here.
    out = gaussian_forward(x, log_emac, scale_factor=1.0, seed=42,
                           noise_type='shot', quantize_energy=False)
    out = jax.block_until_ready(out)

    assert out.shape == x.shape and out.dtype == x.dtype
    # Sanity: noise was actually added (out != x) and is bounded (sd = 0.5 here).
    diff = out - x
    assert float(jnp.max(jnp.abs(diff))) > 0.0
    assert float(jnp.max(jnp.abs(diff))) < 0.5 * 8.0   # within 8 sigma

    print("KERNEL_OK")
</pallas_src>

<mosaic_0001>
module attributes {stable_mosaic.version = 11 : i64} {
  func.func @_gaussian_noise_kernel(%arg0: i32, %arg1: memref<1xi32, #tpu.memory_space<smem>>, %arg2: memref<1xf32, #tpu.memory_space<smem>>, %arg3: memref<8x256xf32, #tpu.memory_space<vmem>>, %arg4: memref<8x1xf32, #tpu.memory_space<vmem>>, %arg5: memref<8x256xf32, #tpu.memory_space<vmem>>) attributes {dimension_semantics = [#tpu.dimension_semantics<parallel>], iteration_bounds = array<i64: 1>, scalar_prefetch = 2 : i64, scratch_operands = 0 : i64, tpu.core_type = #tpu.core_type<tc>, window_params = [{transform_indices = @transform_0, window_bounds = array<i64: 8, 256>}, {transform_indices = @transform_1, window_bounds = array<i64: 8, 1>}, {transform_indices = @transform_2, window_bounds = array<i64: 8, 256>}]} {
    %c0 = arith.constant 0 : index
    %c0_0 = arith.constant 0 : index
    %0 = vector.load %arg4[%c0, %c0_0] : memref<8x1xf32, #tpu.memory_space<vmem>>, vector<8x1xf32>
    %1 = math.exp %0 : vector<8x1xf32>
    %2 = math.rsqrt %1 : vector<8x1xf32>
    %c0_1 = arith.constant 0 : index
    %3 = memref.load %arg2[%c0_1] : memref<1xf32, #tpu.memory_space<smem>>
    %4 = vector.broadcast %3 : f32 to vector<8x1xf32>
    %5 = arith.mulf %2, %4 : vector<8x1xf32>
    %6 = tpu.iota {dimensions = array<i32: 0>} : vector<8x256xi32>
    %7 = tpu.iota {dimensions = array<i32: 1>} : vector<8x256xi32>
    %c8_i32 = arith.constant 8 : i32
    %8 = arith.muli %arg0, %c8_i32 : i32
    %9 = vector.broadcast %8 : i32 to vector<8x256xi32>
    %10 = arith.addi %9, %6 : vector<8x256xi32>
    %c256_i32 = arith.constant 256 : i32
    %11 = vector.broadcast %c256_i32 : i32 to vector<8x256xi32>
    %12 = arith.muli %10, %11 : vector<8x256xi32>
    %13 = arith.addi %12, %7 : vector<8x256xi32>
    %c-1640531527_i32 = arith.constant -1640531527 : i32
    %14 = vector.broadcast %c-1640531527_i32 : i32 to vector<8x256xi32>
    %15 = arith.muli %13, %14 : vector<8x256xi32>
    %c0_2 = arith.constant 0 : index
    %16 = memref.load %arg1[%c0_2] : memref<1xi32, #tpu.memory_space<smem>>
    %17 = vector.broadcast %16 : i32 to vector<8x256xi32>
    %18 = arith.addi %15, %17 : vector<8x256xi32>
    %c625341585_i32 = arith.constant 625341585 : i32
    %19 = vector.broadcast %c625341585_i32 : i32 to vector<8x256xi32>
    %20 = arith.xori %18, %19 : vector<8x256xi32>
    %c16_i32 = arith.constant 16 : i32
    %21 = vector.broadcast %c16_i32 : i32 to vector<8x256xi32>
    %22 = arith.shrsi %20, %21 : vector<8x256xi32>
    %c65535_i32 = arith.constant 65535 : i32
    %23 = vector.broadcast %c65535_i32 : i32 to vector<8x256xi32>
    %24 = arith.andi %22, %23 : vector<8x256xi32>
    %25 = arith.xori %20, %24 : vector<8x256xi32>
    %c-2048144789_i32 = arith.constant -2048144789 : i32
    %26 = vector.broadcast %c-2048144789_i32 : i32 to vector<8x256xi32>
    %27 = arith.muli %25, %26 : vector<8x256xi32>
    %c13_i32 = arith.constant 13 : i32
    %28 = vector.broadcast %c13_i32 : i32 to vector<8x256xi32>
    %29 = arith.shrsi %27, %28 : vector<8x256xi32>
    %c524287_i32 = arith.constant 524287 : i32
    %30 = vector.broadcast %c524287_i32 : i32 to vector<8x256xi32>
    %31 = arith.andi %29, %30 : vector<8x256xi32>
    %32 = arith.xori %27, %31 : vector<8x256xi32>
    %c-1028477387_i32 = arith.constant -1028477387 : i32
    %33 = vector.broadcast %c-1028477387_i32 : i32 to vector<8x256xi32>
    %34 = arith.muli %32, %33 : vector<8x256xi32>
    %c16_i32_3 = arith.constant 16 : i32
    %35 = vector.broadcast %c16_i32_3 : i32 to vector<8x256xi32>
    %36 = arith.shrsi %34, %35 : vector<8x256xi32>
    %c65535_i32_4 = arith.constant 65535 : i32
    %37 = vector.broadcast %c65535_i32_4 : i32 to vector<8x256xi32>
    %38 = arith.andi %36, %37 : vector<8x256xi32>
    %39 = arith.xori %34, %38 : vector<8x256xi32>
    %c8_i32_5 = arith.constant 8 : i32
    %40 = vector.broadcast %c8_i32_5 : i32 to vector<8x256xi32>
    %41 = arith.shrsi %39, %40 : vector<8x256xi32>
    %c16777215_i32 = arith.constant 16777215 : i32
    %42 = vector.broadcast %c16777215_i32 : i32 to vector<8x256xi32>
    %43 = arith.andi %41, %42 : vector<8x256xi32>
    %44 = arith.sitofp %43 : vector<8x256xi32> to vector<8x256xf32>
    %cst = arith.constant 5.96046448E-8 : f32
    %45 = vector.broadcast %cst : f32 to vector<8x256xf32>
    %46 = arith.mulf %44, %45 : vector<8x256xf32>
    %c1759714724_i32 = arith.constant 1759714724 : i32
    %47 = vector.broadcast %c1759714724_i32 : i32 to vector<8x256xi32>
    %48 = arith.xori %18, %47 : vector<8x256xi32>
    %c16_i32_6 = arith.constant 16 : i32
    %49 = vector.broadcast %c16_i32_6 : i32 to vector<8x256xi32>
    %50 = arith.shrsi %48, %49 : vector<8x256xi32>
    %c65535_i32_7 = arith.constant 65535 : i32
    %51 = vector.broadcast %c65535_i32_7 : i32 to vector<8x256xi32>
    %52 = arith.andi %50, %51 : vector<8x256xi32>
    %53 = arith.xori %48, %52 : vector<8x256xi32>
    %c-2048144789_i32_8 = arith.constant -2048144789 : i32
    %54 = vector.broadcast %c-2048144789_i32_8 : i32 to vector<8x256xi32>
    %55 = arith.muli %53, %54 : vector<8x256xi32>
    %c13_i32_9 = arith.constant 13 : i32
    %56 = vector.broadcast %c13_i32_9 : i32 to vector<8x256xi32>
    %57 = arith.shrsi %55, %56 : vector<8x256xi32>
    %c524287_i32_10 = arith.constant 524287 : i32
    %58 = vector.broadcast %c524287_i32_10 : i32 to vector<8x256xi32>
    %59 = arith.andi %57, %58 : vector<8x256xi32>
    %60 = arith.xori %55, %59 : vector<8x256xi32>
    %c-1028477387_i32_11 = arith.constant -1028477387 : i32
    %61 = vector.broadcast %c-1028477387_i32_11 : i32 to vector<8x256xi32>
    %62 = arith.muli %60, %61 : vector<8x256xi32>
    %c16_i32_12 = arith.constant 16 : i32
    %63 = vector.broadcast %c16_i32_12 : i32 to vector<8x256xi32>
    %64 = arith.shrsi %62, %63 : vector<8x256xi32>
    %c65535_i32_13 = arith.constant 65535 : i32
    %65 = vector.broadcast %c65535_i32_13 : i32 to vector<8x256xi32>
    %66 = arith.andi %64, %65 : vector<8x256xi32>
    %67 = arith.xori %62, %66 : vector<8x256xi32>
    %c8_i32_14 = arith.constant 8 : i32
    %68 = vector.broadcast %c8_i32_14 : i32 to vector<8x256xi32>
    %69 = arith.shrsi %67, %68 : vector<8x256xi32>
    %c16777215_i32_15 = arith.constant 16777215 : i32
    %70 = vector.broadcast %c16777215_i32_15 : i32 to vector<8x256xi32>
    %71 = arith.andi %69, %70 : vector<8x256xi32>
    %72 = arith.sitofp %71 : vector<8x256xi32> to vector<8x256xf32>
    %cst_16 = arith.constant 5.96046448E-8 : f32
    %73 = vector.broadcast %cst_16 : f32 to vector<8x256xf32>
    %74 = arith.mulf %72, %73 : vector<8x256xf32>
    %cst_17 = arith.constant 2.98023224E-8 : f32
    %75 = vector.broadcast %cst_17 : f32 to vector<8x256xf32>
    %76 = arith.addf %46, %75 : vector<8x256xf32>
    %77 = math.log %76 : vector<8x256xf32>
    %cst_18 = arith.constant -2.000000e+00 : f32
    %78 = vector.broadcast %cst_18 : f32 to vector<8x256xf32>
    %79 = arith.mulf %78, %77 : vector<8x256xf32>
    %80 = math.sqrt %79 : vector<8x256xf32>
    %cst_19 = arith.constant 6.28318548 : f32
    %81 = vector.broadcast %cst_19 : f32 to vector<8x256xf32>
    %82 = arith.mulf %81, %74 : vector<8x256xf32>
    %83 = math.cos %82 : vector<8x256xf32>
    %84 = arith.mulf %80, %83 : vector<8x256xf32>
    %c0_20 = arith.constant 0 : index
    %c0_21 = arith.constant 0 : index
    %85 = vector.load %arg3[%c0_20, %c0_21] : memref<8x256xf32, #tpu.memory_space<vmem>>, vector<8x256xf32>
    %86 = vector.broadcast %5 : vector<8x1xf32> to vector<8x256xf32>
    %87 = arith.mulf %84, %86 : vector<8x256xf32>
    %88 = arith.addf %85, %87 : vector<8x256xf32>
    %c0_22 = arith.constant 0 : index
    %c0_23 = arith.constant 0 : index
    %89 = vector.load %arg5[%c0_22, %c0_23] : memref<8x256xf32, #tpu.memory_space<vmem>>, vector<8x256xf32>
    tpu.vector_store %arg5[%c0_22, %c0_23], %88 {strides = array<i32>} : memref<8x256xf32, #tpu.memory_space<vmem>>, vector<8x256xf32>,
    return
  }
  func.func @transform_0(%arg0: i32, %arg1: memref<1xi32, #tpu.memory_space<smem>>, %arg2: memref<1xf32, #tpu.memory_space<smem>>) -> (i32, i32) {
    %c0_i32 = arith.constant 0 : i32
    %c0_i32_0 = arith.constant 0 : i32
    return %arg0, %c0_i32 : i32, i32
  }
  func.func @transform_1(%arg0: i32, %arg1: memref<1xi32, #tpu.memory_space<smem>>, %arg2: memref<1xf32, #tpu.memory_space<smem>>) -> (i32, i32) {
    %c0_i32 = arith.constant 0 : i32
    %c0_i32_0 = arith.constant 0 : i32
    return %arg0, %c0_i32 : i32, i32
  }
  func.func @transform_2(%arg0: i32, %arg1: memref<1xi32, #tpu.memory_space<smem>>, %arg2: memref<1xf32, #tpu.memory_space<smem>>) -> (i32, i32) {
    %c0_i32 = arith.constant 0 : i32
    %c0_i32_0 = arith.constant 0 : i32
    return %arg0, %c0_i32 : i32, i32
  }
}

</mosaic_0001>

<llo_original>
// kernel: tpu_custom_call.1
$region0: #{tpu_custom_call.1}
  #allocation0 [shape = 'u32[]', space=smem, size = 0x4, offset = 0x4, fixed_abs, tag = 'smem constant byte address 0x4 - core index']
  #allocation1 [shape = 'u32[144,128]{1,0:T(1,128)}', space=vmem, size = 0x12000, scoped, tag = 'internal scratch']
  #allocation2 [shape = 's32[1]{0}', space=sflag, size = 0x4, scoped, tag = 'scoped memory for tpu_custom_call.1']
  #allocation3 [shape = 's32[1]{0:T(128)S(6)}', space=smem, size = 0x200, scoped, tag = 'prefetched SMEM operand 0']
  #allocation4 [shape = 'f32[1]{0:T(128)S(6)}', space=smem, size = 0x200, scoped, tag = 'prefetched SMEM operand 1']
  %s0 = inlined_call_operand.<no memory space> [shape: s32[1], index: 0, kind: input, shape index: {}]
  %s1 = inlined_call_operand.<no memory space> [shape: f32[1], index: 1, kind: input, shape index: {}]
  %s2 = inlined_call_operand.hbm [shape: f32[8,256], index: 2, kind: input, shape index: {}]
  %s3 = inlined_call_operand.vmem [shape: f32[8,1], index: 3, kind: input, shape index: {}]
  %s4 = inlined_call_operand.hbm [shape: f32[8,256], index: 4, kind: output, shape index: {}]
  %s5 = sld [smem:[#allocation0]]
  $region22: #{tpu_custom_call.1} parent=0
    _
  %s7 = ssub.s32 1, %s5
  %s8 = scalar_select 0, %s7, %s5
  %9 = sst [smem:[#allocation3]] %s0
  %10 = sst [smem:[#allocation4]] %s1
  $region1: #{tpu_custom_call.1} parent=0
    #allocation5 [shape = 'u8[8192]{0}', space=vmem, size = 0x2000, scoped, tag = 'input window, operand 2, single buffered']
    #allocation6 [shape = 's32[1]{0}', space=sflag, size = 0x4, scoped, tag = 'scoped memory for tpu_custom_call.1']
    #allocation7 [shape = 's32[1]{0}', space=sflag, size = 0x4, scoped, tag = 'scoped memory for tpu_custom_call.1']
    #allocation8 [shape = 'u8[8192]{0}', space=vmem, size = 0x2000, scoped, tag = 'output window, operand 0, single buffered']
    %11 = vsyncpa [#allocation6], 0
    %12 = vsyncpa [#allocation7], 0
    // Predicated region
    $region2: #{tpu_custom_call.1} parent=1 // pred_check
      _
    $region3: #{tpu_custom_call.1} parent=1 // pred_check_branch
      %14 = sbr.rel (0) target = $region5
    $region4: #{tpu_custom_call.1} parent=1 // pred_region
      %s16 = ssub.s32 256, 256
      %17 = vsyncadd [#allocation6], %s16
      %s19 = sshll.u32 [#allocation5], 4
      %s20 = int_to_ptr.vmem [resolvable:$true] %s19
      %22 = dma.hbm_to_vmem [thread:$0]  %s2, 256, %s20, [#allocation6]
    $region5: #{tpu_custom_call.1} parent=1 // pred_fallthru
      _
    // Predicated region
    $region6: #{tpu_custom_call.1} parent=1 // pred_check
      _
    $region7: #{tpu_custom_call.1} parent=1 // pred_check_branch
      %24 = sbr.rel (0) target = $region9
    $region8: #{tpu_custom_call.1} parent=1 // pred_region
      _
    $region9: #{tpu_custom_call.1} parent=1 // pred_fallthru
      _
    // Predicated region
    $region10: #{tpu_custom_call.1} parent=1 // pred_check
      _
    $region11: #{tpu_custom_call.1} parent=1 // pred_check_branch
      %26 = sbr.rel (0) target = $region13
    $region12: #{tpu_custom_call.1} parent=1 // pred_region
      %27 = dma.done [#allocation6], 256
    $region13: #{tpu_custom_call.1} parent=1 // pred_fallthru
      _
    %v28 = vld [vmem:[%s3] sm:$0xff]
    %v29 = vmul.f32 %v28, 1.442695
    %v30 = vpow.pop %v29
    %v31 = vrsqrt.pop %v30
    %s32 = sld [smem:[#allocation4]]
    %v33 = vstv %s32
    %v34 = vmul.f32 %v31, %v33
    %v35 = vlaneseq
    %v36 = vshrl.u32 %v35, 7
    %v37 = vlaneseq
    %v38 = vand.u32 %v37, 127
    %v39 = vadd.s32 %v38, 128
    %s40 = smul.u32 0, 8
    %v41 = vstv %s40
    %v42 = vadd.s32 %v41, %v36
    %v43 = vmul.u32 %v42, 256
    %v44 = vadd.s32 %v43, %v38
    %v45 = vadd.s32 %v43, %v39
    %v46 = vmul.u32 %v44, 2654435769
    %v47 = vmul.u32 %v45, 2654435769
    %s48 = sld [smem:[#allocation3]]
    %v49 = vstv %s48
    %v50 = vadd.s32 %v46, %v49
    %v51 = vadd.s32 %v47, %v49
    %v52 = vxor.u32 %v50, 625341585
    %v53 = vxor.u32 %v51, 625341585
    %v54 = vshra.s32 %v52, 16
    %v55 = vshra.s32 %v53, 16
    %v56 = vand.u32 %v54, 65535
    %v57 = vand.u32 %v55, 65535
    %v58 = vxor.u32 %v52, %v56
    %v59 = vxor.u32 %v53, %v57
    %v60 = vmul.u32 %v58, 2246822507
    %v61 = vmul.u32 %v59, 2246822507
    %v62 = vshra.s32 %v60, 13
    %v63 = vshra.s32 %v61, 13
    %v64 = vand.u32 %v62, 524287
    %v65 = vand.u32 %v63, 524287
    %v66 = vxor.u32 %v60, %v64
    %v67 = vxor.u32 %v61, %v65
    %v68 = vmul.u32 %v66, 3266489909
    %v69 = vmul.u32 %v67, 3266489909
    %v70 = vshra.s32 %v68, 16
    %v71 = vshra.s32 %v69, 16
    %v72 = vand.u32 %v70, 65535
    %v73 = vand.u32 %v71, 65535
    %v74 = vxor.u32 %v68, %v72
    %v75 = vxor.u32 %v69, %v73
    %v76 = vshra.s32 %v74, 8
    %v77 = vshra.s32 %v75, 8
    %v78 = vand.u32 %v76, 16777215
    %v79 = vand.u32 %v77, 16777215
    %v80 = vcvt.s32.f32 %v78
    %v81 = vcvt.s32.f32 %v79
    %v82 = vmul.f32 %v80, 5.9604645e-08
    %v83 = vmul.f32 %v81, 5.9604645e-08
    %v84 = vxor.u32 %v50, 1759714724
    %v85 = vxor.u32 %v51, 1759714724
    %v86 = vshra.s32 %v84, 16
    %v87 = vshra.s32 %v85, 16
    %v88 = vand.u32 %v86, 65535
    %v89 = vand.u32 %v87, 65535
    %v90 = vxor.u32 %v84, %v88
    %v91 = vxor.u32 %v85, %v89
    %v92 = vmul.u32 %v90, 2246822507
    %v93 = vmul.u32 %v91, 2246822507
    %v94 = vshra.s32 %v92, 13
    %v95 = vshra.s32 %v93, 13
    %v96 = vand.u32 %v94, 524287
    %v97 = vand.u32 %v95, 524287
    %v98 = vxor.u32 %v92, %v96
    %v99 = vxor.u32 %v93, %v97
    %v100 = vmul.u32 %v98, 3266489909
    %v101 = vmul.u32 %v99, 3266489909
    %v102 = vshra.s32 %v100, 16
    %v103 = vshra.s32 %v101, 16
    %v104 = vand.u32 %v102, 65535
    %v105 = vand.u32 %v103, 65535
    %v106 = vxor.u32 %v100, %v104
    %v107 = vxor.u32 %v101, %v105
    %v108 = vshra.s32 %v106, 8
    %v109 = vshra.s32 %v107, 8
    %v110 = vand.u32 %v108, 16777215
    %v111 = vand.u32 %v109, 16777215
    %v112 = vcvt.s32.f32 %v110
    %v113 = vcvt.s32.f32 %v111
    %v114 = vmul.f32 %v112, 5.9604645e-08
    %v115 = vmul.f32 %v113, 5.9604645e-08
    %v116 = vadd.f32 %v82, 2.9802322e-08
    %v117 = vadd.f32 %v83, 2.9802322e-08
    %v118 = vlog2.pop %v116
    %v119 = vmul.f32 %v118, 0.6931472
    %v120 = vlog2.pop %v117
    %v121 = vmul.f32 %v120, 0.6931472
    %v122 = vmul.f32 %v119, -2.0
    %v123 = vmul.f32 %v121, -2.0
    %v124 = vrsqrt.pop %v122
    %v125 = vmul.f32 %v122, %v124
    %vm126 = vcmp.eq.f32.partialorder %v122, inf
    %v127 = vsel %vm126, %v122, %v125
    %vm128 = vcmp.eq.f32.partialorder %v122, 0.0
    %v129 = vand.u32 %v122, 2147483648
    %v130 = vsel %vm128, %v129, %v127
    %v131 = vrsqrt.pop %v123
    %v132 = vmul.f32 %v123, %v131
    %vm133 = vcmp.eq.f32.partialorder %v123, inf
    %v134 = vsel %vm133, %v123, %v132
    %vm135 = vcmp.eq.f32.partialorder %v123, 0.0
    %v136 = vand.u32 %v123, 2147483648
    %v137 = vsel %vm135, %v136, %v134
    %v138 = vmul.f32 %v114, 6.2831855
    %v139 = vmul.f32 %v115, 6.2831855
    %v140 = vand.u32 2147483647, %v138
    %vm141 = vcmp.le.f32.partialorder %v140, 0.7853982
    %vm142 = vcmp.lt.s32.totalorder %v138, 0
    %v143 = vand.u32 %v138, 2139095040
    %v144 = vshrl.u32 %v143, 23
    %v145 = vsub.s32 %v144, 127
    %v146 = vand.u32 2147483647, %v138
    %v147 = vand.u32 %v146, 8388607
    %v148 = vor.u32 %v147, 8388608
    %v149 = vsub.s32 0, %v148
    %v150 = vadd.s32 %v145, 1
    %vm151 = vcmp.gt.s32.totalorder %v150, 0
    %v152 = vsel %vm151, %v150, 0
    %v153 = vshrl.u32 %v152, 5
    %v154 = vand.u32 %v152, 31
    %v155 = vsub.s32 32, %v154
    %v156 = vshrl.u32 683565275, %v155
    %v157 = vshll.u32 683565275, %v154
    %v158 = vshrl.u32 2475754826, %v155
    %v159 = vor.u32 %v157, %v158
    %v160 = vshll.u32 2475754826, %v154
    %v161 = vshrl.u32 2131351028, %v155
    %v162 = vor.u32 %v160, %v161
    %v163 = vshll.u32 2131351028, %v154
    %v164 = vshrl.u32 2102212464, %v155
    %v165 = vor.u32 %v163, %v164
    %v166 = vshll.u32 2102212464, %v154
    %v167 = vshrl.u32 920167782, %v155
    %v168 = vor.u32 %v166, %v167
    %v169 = vshll.u32 920167782, %v154
    %v170 = vshrl.u32 1326507024, %v155
    %v171 = vor.u32 %v169, %v170
    %vm172 = vcmp.lt.s32.totalorder %v153, 1
    %vm173 = vcmp.lt.s32.totalorder %v153, 2
    %vm174 = vcmp.lt.s32.totalorder %v153, 3
    %vm175 = vcmp.lt.s32.totalorder %v153, 4
    %v176 = vsel %vm172, %v156, %v159
    %v177 = vsel %vm175, %v165, 2102212464
    %v178 = vsel %vm174, %v162, %v177
    %v179 = vsel %vm173, %v176, %v178
    %v180 = vsel %vm172, %v159, %v162
    %v181 = vsel %vm175, %v168, 920167782
    %v182 = vsel %vm174, %v165, %v181
    %v183 = vsel %vm173, %v180, %v182
    %v184 = vsel %vm172, %v162, %v165
    %v185 = vsel %vm175, %v171, 1326507024
    %v186 = vsel %vm174, %v168, %v185
    %v187 = vsel %vm173, %v184, %v186
    %v188 = vshll.u32 %v148, 8
    %v189 = vmul.u32.u64.compose %v188, %v187
    %v190 = vextract.low.u32 %v189
    %v191 = vextract.high.u32 %v189
    %v192 = vmul.u32.u64.compose %v188, %v183
    %v193 = vextract.low.u32 %v192
    %v194 = vextract.high.u32 %v192
    %v195 = vmul.u32 %v188, %v179
    %v196 = vadd.s32 %v191, %v193
    %vm197 = vc.u32 %v191, %v193
    %v198 = vadd.s32 %v194, 1
    %v199 = vsel %vm197, %v198, %v194
    %v200 = vadd.s32 %v195, %v199
    %v201 = vadd.s32 %v200, 536870912
    %v202 = vshrl.u32 %v201, 30
    %v203 = vshll.u32 %v202, 30
    %v204 = vsub.s32 %v200, %v203
    %vm205 = vcmp.lt.s32.totalorder %v204, 0
    %v206 = vsub.s32 0, %v204
    %v207 = vsel %vm205, %v206, %v204
    %v208 = vclz %v207
    %v209 = vsub.s32 %v208, 2
    %vm210 = vcmp.gt.s32.totalorder 0, %v209
    %v211 = vsel %vm210, 0, %v209
    %v212 = vsub.s32 32, %v211
    %v213 = vshll.u32 %v204, %v211
    %v214 = vshrl.u32 %v196, %v212
    %v215 = vor.u32 %v213, %v214
    %v216 = vsub.s32 4294967266, %v211
    %v217 = vadd.s32 %v216, 127
    %v218 = vshll.u32 %v217, 23
    %v219 = vor.u32 4788187, %v218
    %v220 = vand.u32 2147483647, %v219
    %v222 = vcvt.s32.f32 %v215
    %v223 = vmul.f32 %v222, %v220
    %v224 = vxor.u32 %v223, 2147483648
    %v225 = vsel %vm142, %v224, %v223
    %v226 = vsub.s32 4, %v202
    %v227 = vsel %vm142, %v226, %v202
    %v228 = vsel %vm141, %v138, %v225
    %v229 = vsel %vm141, 0, %v227
    %v230 = vcosq.f32.pop %v228
    %v231 = vsinq.f32.pop %v228
    %vm232 = vweird.f32 %v138
    %v233 = vand.u32 %v229, 3
    %vm234 = vcmp.lt.s32.totalorder %v233, 2
    %vm235 = vcmp.eq.s32.totalorder %v233, 0
    %v236 = vxor.u32 %v231, 2147483648
    %v237 = vsel %vm235, %v230, %v236
    %vm238 = vcmp.eq.s32.totalorder %v233, 2
    %v239 = vxor.u32 %v230, 2147483648
    %v240 = vsel %vm238, %v239, %v231
    %v241 = vsel %vm234, %v237, %v240
    %v242 = vsel %vm232, nan, %v241
    %v243 = vand.u32 2147483647, %v139
    %vm244 = vcmp.le.f32.partialorder %v243, 0.7853982
    %vm245 = vcmp.lt.s32.totalorder %v139, 0
    %v246 = vand.u32 %v139, 2139095040
    %v247 = vshrl.u32 %v246, 23
    %v248 = vsub.s32 %v247, 127
    %v249 = vand.u32 2147483647, %v139
    %v250 = vand.u32 %v249, 8388607
    %v251 = vor.u32 %v250, 8388608
    %v252 = vsub.s32 0, %v251
    %v253 = vadd.s32 %v248, 1
    %vm254 = vcmp.gt.s32.totalorder %v253, 0
    %v255 = vsel %vm254, %v253, 0
    %v256 = vshrl.u32 %v255, 5
    %v257 = vand.u32 %v255, 31
    %v258 = vsub.s32 32, %v257
    %v259 = vshrl.u32 683565275, %v258
    %v260 = vshll.u32 683565275, %v257
    %v261 = vshrl.u32 2475754826, %v258
    %v262 = vor.u32 %v260, %v261
    %v263 = vshll.u32 2475754826, %v257
    %v264 = vshrl.u32 2131351028, %v258
    %v265 = vor.u32 %v263, %v264
    %v266 = vshll.u32 2131351028, %v257
    %v267 = vshrl.u32 2102212464, %v258
    %v268 = vor.u32 %v266, %v267
    %v269 = vshll.u32 2102212464, %v257
    %v270 = vshrl.u32 920167782, %v258
    %v271 = vor.u32 %v269, %v270
    %v272 = vshll.u32 920167782, %v257
    %v273 = vshrl.u32 1326507024, %v258
    %v274 = vor.u32 %v272, %v273
    %vm275 = vcmp.lt.s32.totalorder %v256, 1
    %vm276 = vcmp.lt.s32.totalorder %v256, 2
    %vm277 = vcmp.lt.s32.totalorder %v256, 3
    %vm278 = vcmp.lt.s32.totalorder %v256, 4
    %v279 = vsel %vm275, %v259, %v262
    %v280 = vsel %vm278, %v268, 2102212464
    %v281 = vsel %vm277, %v265, %v280
    %v282 = vsel %vm276, %v279, %v281
    %v283 = vsel %vm275, %v262, %v265
    %v284 = vsel %vm278, %v271, 920167782
    %v285 = vsel %vm277, %v268, %v284
    %v286 = vsel %vm276, %v283, %v285
    %v287 = vsel %vm275, %v265, %v268
    %v288 = vsel %vm278, %v274, 1326507024
    %v289 = vsel %vm277, %v271, %v288
    %v290 = vsel %vm276, %v287, %v289
    %v291 = vshll.u32 %v251, 8
    %v292 = vmul.u32.u64.compose %v291, %v290
    %v293 = vextract.low.u32 %v292
    %v294 = vextract.high.u32 %v292
    %v295 = vmul.u32.u64.compose %v291, %v286
    %v296 = vextract.low.u32 %v295
    %v297 = vextract.high.u32 %v295
    %v298 = vmul.u32 %v291, %v282
    %v299 = vadd.s32 %v294, %v296
    %vm300 = vc.u32 %v294, %v296
    %v301 = vadd.s32 %v297, 1
    %v302 = vsel %vm300, %v301, %v297
    %v303 = vadd.s32 %v298, %v302
    %v304 = vadd.s32 %v303, 536870912
    %v305 = vshrl.u32 %v304, 30
    %v306 = vshll.u32 %v305, 30
    %v307 = vsub.s32 %v303, %v306
    %vm308 = vcmp.lt.s32.totalorder %v307, 0
    %v309 = vsub.s32 0, %v307
    %v310 = vsel %vm308, %v309, %v307
    %v311 = vclz %v310
    %v312 = vsub.s32 %v311, 2
    %vm313 = vcmp.gt.s32.totalorder 0, %v312
    %v314 = vsel %vm313, 0, %v312
    %v315 = vsub.s32 32, %v314
    %v316 = vshll.u32 %v307, %v314
    %v317 = vshrl.u32 %v299, %v315
    %v318 = vor.u32 %v316, %v317
    %v319 = vsub.s32 4294967266, %v314
    %v320 = vadd.s32 %v319, 127
    %v321 = vshll.u32 %v320, 23
    %v322 = vor.u32 4788187, %v321
    %v323 = vand.u32 2147483647, %v322
    %v325 = vcvt.s32.f32 %v318
    %v326 = vmul.f32 %v325, %v323
    %v327 = vxor.u32 %v326, 2147483648
    %v328 = vsel %vm245, %v327, %v326
    %v329 = vsub.s32 4, %v305
    %v330 = vsel %vm245, %v329, %v305
    %v331 = vsel %vm244, %v139, %v328
    %v332 = vsel %vm244, 0, %v330
    %v333 = vcosq.f32.pop %v331
    %v334 = vsinq.f32.pop %v331
    %vm335 = vweird.f32 %v139
    %v336 = vand.u32 %v332, 3
    %vm337 = vcmp.lt.s32.totalorder %v336, 2
    %vm338 = vcmp.eq.s32.totalorder %v336, 0
    %v339 = vxor.u32 %v334, 2147483648
    %v340 = vsel %vm338, %v333, %v339
    %vm341 = vcmp.eq.s32.totalorder %v336, 2
    %v342 = vxor.u32 %v333, 2147483648
    %v343 = vsel %vm341, %v342, %v334
    %v344 = vsel %vm337, %v340, %v343
    %v345 = vsel %vm335, nan, %v344
    %v346 = vmul.f32 %v130, %v242
    %v347 = vmul.f32 %v137, %v345
    %v348 = vld [vmem:[#allocation5] sm:$0xff]
    %v349 = vld [vmem:[#allocation5 + $0x8] sm:$0xff]
    %351 = vset.pattern.permute.xlu0 0
    %352 = vperm.xlu0 %351, %v34
    %v353 = vpop.permute.xlu0 %352
    %v355 = vmul.f32 %v346, %v353
    %v356 = vmul.f32 %v347, %v353
    %v357 = vadd.f32 %v348, %v355
    %v358 = vadd.f32 %v349, %v356
    %359 = vst [vmem:[#allocation8] sm:$0xff] %v357
    %360 = vst [vmem:[#allocation8 + $0x8] sm:$0xff] %v358
    // Predicated region
    $region14: #{tpu_custom_call.1} parent=1 // pred_check
      _
    $region15: #{tpu_custom_call.1} parent=1 // pred_check_branch
      %362 = sbr.rel (0) target = $region17
    $region16: #{tpu_custom_call.1} parent=1 // pred_region
      %s364 = ssub.s32 256, 256
      %365 = vsyncadd [#allocation7], %s364
      %s367 = sshll.u32 [#allocation8], 4
      %s368 = int_to_ptr.vmem [resolvable:$true] %s367
      %370 = dma.vmem_to_hbm [thread:$0]  %s368, 256, %s4, [#allocation7]
    $region17: #{tpu_custom_call.1} parent=1 // pred_fallthru
      _
    // Predicated region
    $region18: #{tpu_custom_call.1} parent=1 // pred_check
      _
    $region19: #{tpu_custom_call.1} parent=1 // pred_check_branch
      %372 = sbr.rel (0) target = $region21
    $region20: #{tpu_custom_call.1} parent=1 // pred_region
      %373 = dma.done [#allocation7], 256
    $region21: #{tpu_custom_call.1} parent=1 // pred_fallthru
      _
    %374 = vsyncpa [#allocation6], 1
    %375 = vsyncpa [#allocation7], 1

</llo_original>
